<compile_context>
chip_gen: v6e
topology: v6e:2x2x1
jax: 0.10.0
libtpu: 0.0.40
codegen_flags: <defaults>
</compile_context>

<pallas_src>
import functools

import jax
import jax.numpy as jnp
from jax import lax
from jax.experimental import pallas as pl
from jax.experimental.pallas import tpu as pltpu


def _round_up(n, m):
    return (n + m - 1) // m * m


def _vmem_capacity_bytes():
    """Physical VMEM per TensorCore; conservative 64 MiB (v7x) fallback."""
    try:
        return int(pltpu.get_tpu_info().vmem_capacity_bytes)
    except Exception:
        return 64 * 1024 * 1024


def _pick_hidden_chunk(tk, target=512):
    """Largest multiple of 128 that divides tk and is <= target."""
    c = min(tk, target)
    while tk % c:
        c -= 128
    return c


def _layer_norm_store(total_f32, x_f32, b2, gamma, beta, o_ref, d_in_real):
    """Residual add + LayerNorm epilogue, masked to the real feature width."""
    d_in_pad = o_ref.shape[-1]
    y = total_f32 + b2.astype(jnp.float32) + x_f32
    inv_d = 1.0 / d_in_real
    # padded feature columns of y are exactly zero (x / weights / biases are
    # zero-padded by the wrapper), so the raw sum is already correct; only
    # `centered` needs a mask before the variance.
    mean = jnp.sum(y, axis=-1, keepdims=True) * inv_d
    centered = y - mean
    if d_in_pad != d_in_real:
        mask = (lax.broadcasted_iota(jnp.int32, (1, d_in_pad), 1)
                < d_in_real).astype(jnp.float32)
        centered = centered * mask
    var = jnp.sum(centered * centered, axis=-1, keepdims=True) * inv_d
    normed = centered * lax.rsqrt(var + 1e-6)
    o_ref[...] = (normed * gamma.astype(jnp.float32)
                  + beta.astype(jnp.float32)).astype(o_ref.dtype)


def _ffn_kernel(x_ref, w1_ref, b1_ref, w2_ref, b2_ref, gamma_ref, beta_ref,
                o_ref, *scratch, d_in_real, num_k, n_chunks, chunk):
    tm = x_ref.shape[0]
    d_in_pad = o_ref.shape[-1]
    x = x_ref[...]
    xd = x.astype(w1_ref.dtype)

    def hidden_chunk(start):
        # first linear + ReLU on a bounded hidden slice (MXU, f32 accumulation)
        h = jnp.dot(xd, w1_ref[:, pl.ds(start, chunk)],
                    preferred_element_type=jnp.float32)
        h = jnp.maximum(h + b1_ref[:, pl.ds(start, chunk)].astype(jnp.float32), 0.0)
        # second linear back to d_in, f32 accumulation
        return jnp.dot(h.astype(w2_ref.dtype), w2_ref[pl.ds(start, chunk), :],
                       preferred_element_type=jnp.float32)

    if n_chunks == 1:
        partial = hidden_chunk(0)
    elif n_chunks <= 4:
        # few chunks: static unroll with static slice starts
        partial = hidden_chunk(0)
        for j in range(1, n_chunks):
            partial = partial + hidden_chunk(j * chunk)
    else:
        def body(j, acc):
            start = pl.multiple_of(j * chunk, 128)
            return acc + hidden_chunk(start)
        partial = lax.fori_loop(0, n_chunks, body,
                                jnp.zeros((tm, d_in_pad), jnp.float32))

    if num_k == 1:
        # single K step: no VMEM accumulator round trip at all
        _layer_norm_store(partial, x.astype(jnp.float32), b2_ref[...],
                          gamma_ref[...], beta_ref[...], o_ref, d_in_real)
    else:
        acc_ref = scratch[0]
        k = pl.program_id(1)

        @pl.when(k == 0)
        def _():
            acc_ref[...] = partial

        @pl.when(jnp.logical_and(k > 0, k < num_k - 1))
        def _():
            acc_ref[...] += partial

        @pl.when(k == num_k - 1)
        def _():
            _layer_norm_store(acc_ref[...] + partial, x.astype(jnp.float32),
                              b2_ref[...], gamma_ref[...], beta_ref[...],
                              o_ref, d_in_real)


def positionwise_feed_forward(x, w1, b1, w2, b2, gamma, beta, *, tm=None,
                              matmul_dtype=None, weight_vmem_budget=None):
    """x: [B, S, d_in]. w1: [d_in, d_hid], w2: [d_hid, d_in] (pre-transposed vs
    torch nn.Linear weight layout). Dropout is identity (eval mode).

    matmul_dtype: optional dtype (e.g. jnp.bfloat16) for the MXU operands of the
    two matmuls (accumulation stays f32). Default None keeps the input dtype.
    """
    B, S, d_in = x.shape
    d_hid = w1.shape[1]
    assert w1.shape == (d_in, d_hid) and w2.shape == (d_hid, d_in)
    M = B * S

    if matmul_dtype is not None:
        w1 = w1.astype(matmul_dtype)
        w2 = w2.astype(matmul_dtype)

    w_itemsize = jnp.dtype(w1.dtype).itemsize
    x_itemsize = jnp.dtype(x.dtype).itemsize

    # ---- chip-aware VMEM budgeting ------------------------------------------
    vmem_cap = _vmem_capacity_bytes()       # 64 MiB (v7x) .. 128 MiB (v5e/v6e)
    vmem_ceiling = int(vmem_cap * 0.9)      # never request more than physical
    if weight_vmem_budget is None:
        weight_vmem_budget = min(40 * 1024 * 1024, int(vmem_cap * 0.35))
    stream_buf = 3 if vmem_cap >= 100 * 1024 * 1024 else 2  # deeper prefetch on 128 MiB chips

    # lane-dense feature dims (multiples of 128): unmasked stores, full MXU lanes
    d_in_pad = _round_up(d_in, 128)
    d_hid128 = _round_up(d_hid, 128)

    # hidden-dim grid tile: keep the full weights resident (single-buffered,
    # constant index maps => DMA'd exactly once) when they fit the budget;
    # otherwise stream K-tiles sized as a near-divisor of d_hid (minimal padding).
    resident_bytes = (2 * d_in_pad * d_hid128 + d_hid128) * w_itemsize
    if resident_bytes <= weight_vmem_budget:
        num_k, tk = 1, d_hid128
    else:
        per_col = stream_buf * (2 * d_in_pad + 1) * w_itemsize
        tk_max = max(128, (weight_vmem_budget // per_col) // 128 * 128)
        tk_max = min(tk_max, d_hid128)
        num_k = -(-d_hid128 // tk_max)
        tk = _round_up(-(-d_hid128 // num_k), 128)
    d_hid_pad = tk * num_k

    # hidden sub-tile inside the kernel: bounds the (tm, chunk) ReLU intermediate
    chunk = _pick_hidden_chunk(tk)
    n_chunks = tk // chunk

    # ---- row tile ------------------------------------------------------------
    if tm is None:
        # streaming re-reads the weights once per row tile, so raise tm until the
        # weight stream clears the HBM roofline; resident weights need less.
        tm = 256 if num_k == 1 else 768
    tm = _round_up(min(tm, _round_up(M, 8)), 8)

    def _vmem_est(tm_):
        n_wbuf = 1 if num_k == 1 else stream_buf
        weights = n_wbuf * (2 * d_in_pad * tk + tk) * w_itemsize
        vecs = 3 * d_in_pad * 4
        xio = 2 * 2 * tm_ * d_in_pad * x_itemsize          # x + out, double-buffered
        accs = tm_ * d_in_pad * 4 * (2 if num_k > 1 else 1)  # partial (+ acc scratch)
        hbuf = 2 * tm_ * chunk * 4                         # relu chunk + cast copy
        return weights + vecs + xio + accs + hbuf

    while tm > 64 and _vmem_est(tm) > int(vmem_cap * 0.8):
        tm = _round_up(max(64, tm // 2), 8)

    M_pad = _round_up(M, tm)
    n_row_tiles = M_pad // tm

    # ---- zero padding (keeps LN statistics exact) ----------------------------
    # TODO(synk): hoist the weight/bias/LN-param padding to model-load time for
    # real per-layer usage; here it is done per call to stay self-contained.
    def pad2(a, rows, cols):
        pr, pc = rows - a.shape[0], cols - a.shape[1]
        return a if (pr == 0 and pc == 0) else jnp.pad(a, ((0, pr), (0, pc)))

    def pad1(v, n):
        p = n - v.shape[0]
        v = v if p == 0 else jnp.pad(v, (0, p))
        return v.reshape(1, n)

    x2d = pad2(x.reshape(M, d_in), M_pad, d_in_pad)
    w1p = pad2(w1, d_in_pad, d_hid_pad)
    w2p = pad2(w2, d_hid_pad, d_in_pad)
    b1p = pad1(b1, d_hid_pad)
    b2p = pad1(b2, d_in_pad)
    gp = pad1(gamma, d_in_pad)
    bp = pad1(beta, d_in_pad)

    vmem_limit = int(min(vmem_ceiling, max(32 * 1024 * 1024,
                                           int(_vmem_est(tm) * 1.4))))

    cost = pl.CostEstimate(
        flops=4 * M_pad * d_in_pad * d_hid_pad,
        transcendentals=M_pad,
        bytes_accessed=(2 * M_pad * d_in_pad * x_itemsize
                        + (1 if num_k == 1 else n_row_tiles)
                        * (w1p.size + w2p.size) * w_itemsize
                        + (b1p.size + b2p.size + gp.size + bp.size) * 4),
    )

    kernel = functools.partial(_ffn_kernel, d_in_real=d_in, num_k=num_k,
                               n_chunks=n_chunks, chunk=chunk)
    scratch = [pltpu.VMEM((tm, d_in_pad), jnp.float32)] if num_k > 1 else []

    def build_specs(use_pipeline_mode):
        def mode(constant_index):
            if not use_pipeline_mode:
                return {}
            if constant_index:
                return {"pipeline_mode": pl.Buffered(1)}   # DMA'd once, 1 buffer
            if stream_buf != 2:
                return {"pipeline_mode": pl.Buffered(stream_buf)}
            return {}

        resident = num_k == 1
        in_specs = [
            pl.BlockSpec((tm, d_in_pad), lambda i, k: (i, 0)),                    # x rows
            pl.BlockSpec((d_in_pad, tk), lambda i, k: (0, k), **mode(resident)),  # w1
            pl.BlockSpec((1, tk), lambda i, k: (0, k), **mode(resident)),         # b1
            pl.BlockSpec((tk, d_in_pad), lambda i, k: (k, 0), **mode(resident)),  # w2
            pl.BlockSpec((1, d_in_pad), lambda i, k: (0, 0), **mode(True)),       # b2
            pl.BlockSpec((1, d_in_pad), lambda i, k: (0, 0), **mode(True)),       # LN weight
            pl.BlockSpec((1, d_in_pad), lambda i, k: (0, 0), **mode(True)),       # LN bias
        ]
        out_spec = pl.BlockSpec((tm, d_in_pad), lambda i, k: (i, 0))
        return in_specs, out_spec

    def run(use_pipeline_mode):
        in_specs, out_spec = build_specs(use_pipeline_mode)
        return pl.pallas_call(
            kernel,
            out_shape=jax.ShapeDtypeStruct((M_pad, d_in_pad), x.dtype),
            grid_spec=pltpu.PrefetchScalarGridSpec(
                num_scalar_prefetch=0,
                grid=(n_row_tiles, num_k),
                in_specs=in_specs,
                out_specs=out_spec,
                scratch_shapes=scratch),
            compiler_params=pltpu.CompilerParams(
                dimension_semantics=("parallel", "arbitrary"),
                vmem_limit_bytes=vmem_limit),
            cost_estimate=cost,
        )(x2d, w1p, b1p, w2p, b2p, gp, bp)

    try:
        out = run(True)
    except Exception:
        # pipeline_mode / Buffered not available in this jax build: fall back to
        # default double buffering (correctness identical, slightly more VMEM).
        out = run(False)

    return out[:M, :d_in].reshape(B, S, d_in)


def reference(x, w1, b1, w2, b2, gamma, beta):
    h = jnp.maximum(x @ w1 + b1, 0.0)
    y = h @ w2 + b2 + x
    mean = jnp.mean(y, axis=-1, keepdims=True)
    var = jnp.mean((y - mean) ** 2, axis=-1, keepdims=True)
    return (y - mean) / jnp.sqrt(var + 1e-6) * gamma + beta


if __name__ == "__main__":
    key = jax.random.PRNGKey(0)

    def make_inputs(k, B, S, d_in, d_hid):
        kx, k1, k2, k3, k4 = jax.random.split(k, 5)
        x = jax.random.normal(kx, (B, S, d_in), dtype=jnp.float32)
        w1 = jax.random.normal(k1, (d_in, d_hid), jnp.float32) / jnp.sqrt(1.0 * d_in)
        b1 = jax.random.normal(k2, (d_hid,), jnp.float32) * 0.01
        w2 = jax.random.normal(k3, (d_hid, d_in), jnp.float32) / jnp.sqrt(1.0 * d_hid)
        b2 = jax.random.normal(k4, (d_in,), jnp.float32) * 0.01
        gamma = jnp.ones((d_in,), jnp.float32)
        beta = jnp.zeros((d_in,), jnp.float32)
        return x, w1, b1, w2, b2, gamma, beta

    cases = [
        # (B, S, d_in, d_hid, kwargs, atol, rtol)
        (2, 8, 32, 64, {}, 1e-5, 1e-5),                 # unaligned dims -> masked LN
        (2, 8, 128, 256, {}, 1e-5, 1e-5),               # aligned fast path
        (2, 16, 128, 1024, {}, 1e-4, 1e-5),             # resident weights, chunked hidden loop
        (2, 16, 128, 1024, {"weight_vmem_budget": 1 << 20}, 1e-4, 1e-5),  # streamed K-tiles
        (2, 8, 128, 256, {"matmul_dtype": jnp.bfloat16}, 5e-2, 5e-2),     # bf16 MXU path
    ]

    for (B, S, d_in, d_hid, kwargs, atol, rtol) in cases:
        key, sub = jax.random.split(key)
        args = make_inputs(sub, B, S, d_in, d_hid)
        out = positionwise_feed_forward(*args, **kwargs)
        out = jax.block_until_ready(out)
        ref = reference(*args)
        assert jnp.allclose(out, ref, atol=atol, rtol=rtol), \
            f"mismatch vs reference for {(B, S, d_in, d_hid, kwargs)}"

    print("KERNEL_OK")
</pallas_src>

<mosaic_0001>
module attributes {stable_mosaic.version = 11 : i64} {
  func.func @_ffn_kernel(%arg0: i32, %arg1: i32, %arg2: memref<16x128xf32, #tpu.memory_space<vmem>>, %arg3: memref<128x128xf32, #tpu.memory_space<vmem>>, %arg4: memref<1x128xf32, #tpu.memory_space<vmem>>, %arg5: memref<128x128xf32, #tpu.memory_space<vmem>>, %arg6: memref<1x128xf32, #tpu.memory_space<vmem>>, %arg7: memref<1x128xf32, #tpu.memory_space<vmem>>, %arg8: memref<1x128xf32, #tpu.memory_space<vmem>>, %arg9: memref<16x128xf32, #tpu.memory_space<vmem>>) attributes {dimension_semantics = [#tpu.dimension_semantics<parallel>, #tpu.dimension_semantics<arbitrary>], iteration_bounds = array<i64: 1, 1>, scalar_prefetch = 0 : i64, scratch_operands = 0 : i64, tpu.core_type = #tpu.core_type<tc>, window_params = [{transform_indices = @transform_0, window_bounds = array<i64: 16, 128>}, {pipeline_mode = #tpu.pipeline_mode<synchronous>, transform_indices = @transform_1, window_bounds = array<i64: 128, 128>}, {pipeline_mode = #tpu.pipeline_mode<synchronous>, transform_indices = @transform_2, window_bounds = array<i64: 1, 128>}, {pipeline_mode = #tpu.pipeline_mode<synchronous>, transform_indices = @transform_3, window_bounds = array<i64: 128, 128>}, {pipeline_mode = #tpu.pipeline_mode<synchronous>, transform_indices = @transform_4, window_bounds = array<i64: 1, 128>}, {pipeline_mode = #tpu.pipeline_mode<synchronous>, transform_indices = @transform_5, window_bounds = array<i64: 1, 128>}, {pipeline_mode = #tpu.pipeline_mode<synchronous>, transform_indices = @transform_6, window_bounds = array<i64: 1, 128>}, {transform_indices = @transform_7, window_bounds = array<i64: 16, 128>}]} {
    %c0 = arith.constant 0 : index
    %c0_0 = arith.constant 0 : index
    %0 = vector.load %arg2[%c0, %c0_0] : memref<16x128xf32, #tpu.memory_space<vmem>>, vector<16x128xf32>
    %c0_1 = arith.constant 0 : index
    %c0_2 = arith.constant 0 : index
    %1 = vector.load %arg3[%c0_1, %c0_2] : memref<128x128xf32, #tpu.memory_space<vmem>>, vector<128x128xf32>
    %cst = arith.constant dense<0.000000e+00> : vector<16x128xf32>
    %2 = tpu.matmul %0, %1, %cst {dimension_numbers = #tpu.dot_dimension_numbers<[1], [0], [0], [1], [0, 0, 1, 1], [], []>} : vector<16x128xf32>, vector<128x128xf32>, vector<16x128xf32> -> vector<16x128xf32>
    %c0_3 = arith.constant 0 : index
    %c0_4 = arith.constant 0 : index
    %3 = vector.load %arg4[%c0_3, %c0_4] : memref<1x128xf32, #tpu.memory_space<vmem>>, vector<1x128xf32>
    %4 = vector.broadcast %3 : vector<1x128xf32> to vector<16x128xf32>
    %5 = arith.addf %2, %4 : vector<16x128xf32>
    %cst_5 = arith.constant 0.000000e+00 : f32
    %6 = vector.broadcast %cst_5 : f32 to vector<16x128xf32>
    %7 = arith.maximumf %5, %6 : vector<16x128xf32>
    %c0_6 = arith.constant 0 : index
    %c0_7 = arith.constant 0 : index
    %8 = vector.load %arg5[%c0_6, %c0_7] : memref<128x128xf32, #tpu.memory_space<vmem>>, vector<128x128xf32>
    %cst_8 = arith.constant dense<0.000000e+00> : vector<16x128xf32>
    %9 = tpu.matmul %7, %8, %cst_8 {dimension_numbers = #tpu.dot_dimension_numbers<[1], [0], [0], [1], [0, 0, 1, 1], [], []>} : vector<16x128xf32>, vector<128x128xf32>, vector<16x128xf32> -> vector<16x128xf32>
    %c0_9 = arith.constant 0 : index
    %c0_10 = arith.constant 0 : index
    %10 = vector.load %arg6[%c0_9, %c0_10] : memref<1x128xf32, #tpu.memory_space<vmem>>, vector<1x128xf32>
    %c0_11 = arith.constant 0 : index
    %c0_12 = arith.constant 0 : index
    %11 = vector.load %arg7[%c0_11, %c0_12] : memref<1x128xf32, #tpu.memory_space<vmem>>, vector<1x128xf32>
    %c0_13 = arith.constant 0 : index
    %c0_14 = arith.constant 0 : index
    %12 = vector.load %arg8[%c0_13, %c0_14] : memref<1x128xf32, #tpu.memory_space<vmem>>, vector<1x128xf32>
    %13 = vector.broadcast %10 : vector<1x128xf32> to vector<16x128xf32>
    %14 = arith.addf %9, %13 : vector<16x128xf32>
    %15 = arith.addf %14, %0 : vector<16x128xf32>
    %cst_15 = arith.constant dense<0.000000e+00> : vector<16xf32>
    %16 = vector.multi_reduction <add>, %15, %cst_15 [1] : vector<16x128xf32> to vector<16xf32>
    %17 = vector.shape_cast %16 : vector<16xf32> to vector<16x1xf32>
    %cst_16 = arith.constant 3.125000e-02 : f32
    %18 = vector.broadcast %cst_16 : f32 to vector<16x1xf32>
    %19 = arith.mulf %17, %18 : vector<16x1xf32>
    %20 = vector.broadcast %19 : vector<16x1xf32> to vector<16x128xf32>
    %21 = arith.subf %15, %20 : vector<16x128xf32>
    %22 = tpu.iota {dimensions = array<i32: 1>} : vector<1x128xi32>
    %c32_i32 = arith.constant 32 : i32
    %23 = vector.broadcast %c32_i32 : i32 to vector<1x128xi32>
    %24 = arith.cmpi slt, %22, %23 : vector<1x128xi32>
    %25 = arith.extui %24 : vector<1x128xi1> to vector<1x128xi32>
    %26 = arith.sitofp %25 : vector<1x128xi32> to vector<1x128xf32>
    %27 = vector.broadcast %26 : vector<1x128xf32> to vector<16x128xf32>
    %28 = arith.mulf %21, %27 : vector<16x128xf32>
    %29 = arith.mulf %28, %28 : vector<16x128xf32>
    %cst_17 = arith.constant dense<0.000000e+00> : vector<16xf32>
    %30 = vector.multi_reduction <add>, %29, %cst_17 [1] : vector<16x128xf32> to vector<16xf32>
    %31 = vector.shape_cast %30 : vector<16xf32> to vector<16x1xf32>
    %cst_18 = arith.constant 3.125000e-02 : f32
    %32 = vector.broadcast %cst_18 : f32 to vector<16x1xf32>
    %33 = arith.mulf %31, %32 : vector<16x1xf32>
    %cst_19 = arith.constant 9.99999997E-7 : f32
    %34 = vector.broadcast %cst_19 : f32 to vector<16x1xf32>
    %35 = arith.addf %33, %34 : vector<16x1xf32>
    %36 = math.rsqrt %35 : vector<16x1xf32>
    %37 = vector.broadcast %36 : vector<16x1xf32> to vector<16x128xf32>
    %38 = arith.mulf %28, %37 : vector<16x128xf32>
    %39 = vector.broadcast %11 : vector<1x128xf32> to vector<16x128xf32>
    %40 = arith.mulf %38, %39 : vector<16x128xf32>
    %41 = vector.broadcast %12 : vector<1x128xf32> to vector<16x128xf32>
    %42 = arith.addf %40, %41 : vector<16x128xf32>
    %c0_20 = arith.constant 0 : index
    %c0_21 = arith.constant 0 : index
    %43 = vector.load %arg9[%c0_20, %c0_21] : memref<16x128xf32, #tpu.memory_space<vmem>>, vector<16x128xf32>
    tpu.vector_store %arg9[%c0_20, %c0_21], %42 {strides = array<i32>} : memref<16x128xf32, #tpu.memory_space<vmem>>, vector<16x128xf32>,
    return
  }
  func.func @transform_0(%arg0: i32, %arg1: i32) -> (i32, i32) {
    %c0_i32 = arith.constant 0 : i32
    %c0_i32_0 = arith.constant 0 : i32
    return %arg0, %c0_i32 : i32, i32
  }
  func.func @transform_1(%arg0: i32, %arg1: i32) -> (i32, i32) {
    %c0_i32 = arith.constant 0 : i32
    %c0_i32_0 = arith.constant 0 : i32
    return %c0_i32, %arg1 : i32, i32
  }
  func.func @transform_2(%arg0: i32, %arg1: i32) -> (i32, i32) {
    %c0_i32 = arith.constant 0 : i32
    %c0_i32_0 = arith.constant 0 : i32
    return %c0_i32, %arg1 : i32, i32
  }
  func.func @transform_3(%arg0: i32, %arg1: i32) -> (i32, i32) {
    %c0_i32 = arith.constant 0 : i32
    %c0_i32_0 = arith.constant 0 : i32
    return %arg1, %c0_i32 : i32, i32
  }
  func.func @transform_4(%arg0: i32, %arg1: i32) -> (i32, i32) {
    %c0_i32 = arith.constant 0 : i32
    %c0_i32_0 = arith.constant 0 : i32
    %c0_i32_1 = arith.constant 0 : i32
    return %c0_i32, %c0_i32_0 : i32, i32
  }
  func.func @transform_5(%arg0: i32, %arg1: i32) -> (i32, i32) {
    %c0_i32 = arith.constant 0 : i32
    %c0_i32_0 = arith.constant 0 : i32
    %c0_i32_1 = arith.constant 0 : i32
    return %c0_i32, %c0_i32_0 : i32, i32
  }
  func.func @transform_6(%arg0: i32, %arg1: i32) -> (i32, i32) {
    %c0_i32 = arith.constant 0 : i32
    %c0_i32_0 = arith.constant 0 : i32
    %c0_i32_1 = arith.constant 0 : i32
    return %c0_i32, %c0_i32_0 : i32, i32
  }
  func.func @transform_7(%arg0: i32, %arg1: i32) -> (i32, i32) {
    %c0_i32 = arith.constant 0 : i32
    %c0_i32_0 = arith.constant 0 : i32
    return %arg0, %c0_i32 : i32, i32
  }
}

module attributes {stable_mosaic.version = 11 : i64} {
  func.func @_ffn_kernel(%arg0: i32, %arg1: i32, %arg2: memref<16x128xf32, #tpu.memory_space<vmem>>, %arg3: memref<128x128xf32, #tpu.memory_space<vmem>>, %arg4: memref<1x128xf32, #tpu.memory_space<vmem>>, %arg5: memref<128x128xf32, #tpu.memory_space<vmem>>, %arg6: memref<1x128xf32, #tpu.memory_space<vmem>>, %arg7: memref<1x128xf32, #tpu.memory_space<vmem>>, %arg8: memref<1x128xf32, #tpu.memory_space<vmem>>, %arg9: memref<16x128xf32, #tpu.memory_space<vmem>>) attributes {dimension_semantics = [#tpu.dimension_semantics<parallel>, #tpu.dimension_semantics<arbitrary>], iteration_bounds = array<i64: 1, 1>, scalar_prefetch = 0 : i64, scratch_operands = 0 : i64, tpu.core_type = #tpu.core_type<tc>, window_params = [{transform_indices = @transform_0, window_bounds = array<i64: 16, 128>}, {transform_indices = @transform_1, window_bounds = array<i64: 128, 128>}, {transform_indices = @transform_2, window_bounds = array<i64: 1, 128>}, {transform_indices = @transform_3, window_bounds = array<i64: 128, 128>}, {pipeline_mode = #tpu.pipeline_mode<synchronous>, transform_indices = @transform_4, window_bounds = array<i64: 1, 128>}, {pipeline_mode = #tpu.pipeline_mode<synchronous>, transform_indices = @transform_5, window_bounds = array<i64: 1, 128>}, {pipeline_mode = #tpu.pipeline_mode<synchronous>, transform_indices = @transform_6, window_bounds = array<i64: 1, 128>}, {transform_indices = @transform_7, window_bounds = array<i64: 16, 128>}]} {
    %c0 = arith.constant 0 : index
    %c0_0 = arith.constant 0 : index
    %0 = vector.load %arg2[%c0, %c0_0] : memref<16x128xf32, #tpu.memory_space<vmem>>, vector<16x128xf32>
    %c0_1 = arith.constant 0 : index
    %c0_2 = arith.constant 0 : index
    %1 = vector.load %arg3[%c0_1, %c0_2] : memref<128x128xf32, #tpu.memory_space<vmem>>, vector<128x128xf32>
    %cst = arith.constant dense<0.000000e+00> : vector<16x128xf32>
    %2 = tpu.matmul %0, %1, %cst {dimension_numbers = #tpu.dot_dimension_numbers<[1], [0], [0], [1], [0, 0, 1, 1], [], []>} : vector<16x128xf32>, vector<128x128xf32>, vector<16x128xf32> -> vector<16x128xf32>
    %c0_3 = arith.constant 0 : index
    %c0_4 = arith.constant 0 : index
    %3 = vector.load %arg4[%c0_3, %c0_4] : memref<1x128xf32, #tpu.memory_space<vmem>>, vector<1x128xf32>
    %4 = vector.broadcast %3 : vector<1x128xf32> to vector<16x128xf32>
    %5 = arith.addf %2, %4 : vector<16x128xf32>
    %cst_5 = arith.constant 0.000000e+00 : f32
    %6 = vector.broadcast %cst_5 : f32 to vector<16x128xf32>
    %7 = arith.maximumf %5, %6 : vector<16x128xf32>
    %c0_6 = arith.constant 0 : index
    %c0_7 = arith.constant 0 : index
    %8 = vector.load %arg5[%c0_6, %c0_7] : memref<128x128xf32, #tpu.memory_space<vmem>>, vector<128x128xf32>
    %cst_8 = arith.constant dense<0.000000e+00> : vector<16x128xf32>
    %9 = tpu.matmul %7, %8, %cst_8 {dimension_numbers = #tpu.dot_dimension_numbers<[1], [0], [0], [1], [0, 0, 1, 1], [], []>} : vector<16x128xf32>, vector<128x128xf32>, vector<16x128xf32> -> vector<16x128xf32>
    %c0_9 = arith.constant 0 : index
    %c0_10 = arith.constant 0 : index
    %10 = vector.load %arg6[%c0_9, %c0_10] : memref<1x128xf32, #tpu.memory_space<vmem>>, vector<1x128xf32>
    %c0_11 = arith.constant 0 : index
    %c0_12 = arith.constant 0 : index
    %11 = vector.load %arg7[%c0_11, %c0_12] : memref<1x128xf32, #tpu.memory_space<vmem>>, vector<1x128xf32>
    %c0_13 = arith.constant 0 : index
    %c0_14 = arith.constant 0 : index
    %12 = vector.load %arg8[%c0_13, %c0_14] : memref<1x128xf32, #tpu.memory_space<vmem>>, vector<1x128xf32>
    %13 = vector.broadcast %10 : vector<1x128xf32> to vector<16x128xf32>
    %14 = arith.addf %9, %13 : vector<16x128xf32>
    %15 = arith.addf %14, %0 : vector<16x128xf32>
    %cst_15 = arith.constant dense<0.000000e+00> : vector<16xf32>
    %16 = vector.multi_reduction <add>, %15, %cst_15 [1] : vector<16x128xf32> to vector<16xf32>
    %17 = vector.shape_cast %16 : vector<16xf32> to vector<16x1xf32>
    %cst_16 = arith.constant 3.125000e-02 : f32
    %18 = vector.broadcast %cst_16 : f32 to vector<16x1xf32>
    %19 = arith.mulf %17, %18 : vector<16x1xf32>
    %20 = vector.broadcast %19 : vector<16x1xf32> to vector<16x128xf32>
    %21 = arith.subf %15, %20 : vector<16x128xf32>
    %22 = tpu.iota {dimensions = array<i32: 1>} : vector<1x128xi32>
    %c32_i32 = arith.constant 32 : i32
    %23 = vector.broadcast %c32_i32 : i32 to vector<1x128xi32>
    %24 = arith.cmpi slt, %22, %23 : vector<1x128xi32>
    %25 = arith.extui %24 : vector<1x128xi1> to vector<1x128xi32>
    %26 = arith.sitofp %25 : vector<1x128xi32> to vector<1x128xf32>
    %27 = vector.broadcast %26 : vector<1x128xf32> to vector<16x128xf32>
    %28 = arith.mulf %21, %27 : vector<16x128xf32>
    %29 = arith.mulf %28, %28 : vector<16x128xf32>
    %cst_17 = arith.constant dense<0.000000e+00> : vector<16xf32>
    %30 = vector.multi_reduction <add>, %29, %cst_17 [1] : vector<16x128xf32> to vector<16xf32>
    %31 = vector.shape_cast %30 : vector<16xf32> to vector<16x1xf32>
    %cst_18 = arith.constant 3.125000e-02 : f32
    %32 = vector.broadcast %cst_18 : f32 to vector<16x1xf32>
    %33 = arith.mulf %31, %32 : vector<16x1xf32>
    %cst_19 = arith.constant 9.99999997E-7 : f32
    %34 = vector.broadcast %cst_19 : f32 to vector<16x1xf32>
    %35 = arith.addf %33, %34 : vector<16x1xf32>
    %36 = math.rsqrt %35 : vector<16x1xf32>
    %37 = vector.broadcast %36 : vector<16x1xf32> to vector<16x128xf32>
    %38 = arith.mulf %28, %37 : vector<16x128xf32>
    %39 = vector.broadcast %11 : vector<1x128xf32> to vector<16x128xf32>
    %40 = arith.mulf %38, %39 : vector<16x128xf32>
    %41 = vector.broadcast %12 : vector<1x128xf32> to vector<16x128xf32>
    %42 = arith.addf %40, %41 : vector<16x128xf32>
    %c0_20 = arith.constant 0 : index
    %c0_21 = arith.constant 0 : index
    %43 = vector.load %arg9[%c0_20, %c0_21] : memref<16x128xf32, #tpu.memory_space<vmem>>, vector<16x128xf32>
    tpu.vector_store %arg9[%c0_20, %c0_21], %42 {strides = array<i32>} : memref<16x128xf32, #tpu.memory_space<vmem>>, vector<16x128xf32>,
    return
  }
  func.func @transform_0(%arg0: i32, %arg1: i32) -> (i32, i32) {
    %c0_i32 = arith.constant 0 : i32
    %c0_i32_0 = arith.constant 0 : i32
    return %arg0, %c0_i32 : i32, i32
  }
  func.func @transform_1(%arg0: i32, %arg1: i32) -> (i32, i32) {
    %c0_i32 = arith.constant 0 : i32
    %c0_i32_0 = arith.constant 0 : i32
    return %c0_i32, %arg1 : i32, i32
  }
  func.func @transform_2(%arg0: i32, %arg1: i32) -> (i32, i32) {
    %c0_i32 = arith.constant 0 : i32
    %c0_i32_0 = arith.constant 0 : i32
    return %c0_i32, %arg1 : i32, i32
  }
  func.func @transform_3(%arg0: i32, %arg1: i32) -> (i32, i32) {
    %c0_i32 = arith.constant 0 : i32
    %c0_i32_0 = arith.constant 0 : i32
    return %arg1, %c0_i32 : i32, i32
  }
  func.func @transform_4(%arg0: i32, %arg1: i32) -> (i32, i32) {
    %c0_i32 = arith.constant 0 : i32
    %c0_i32_0 = arith.constant 0 : i32
    %c0_i32_1 = arith.constant 0 : i32
    return %c0_i32, %c0_i32_0 : i32, i32
  }
  func.func @transform_5(%arg0: i32, %arg1: i32) -> (i32, i32) {
    %c0_i32 = arith.constant 0 : i32
    %c0_i32_0 = arith.constant 0 : i32
    %c0_i32_1 = arith.constant 0 : i32
    return %c0_i32, %c0_i32_0 : i32, i32
  }
  func.func @transform_6(%arg0: i32, %arg1: i32) -> (i32, i32) {
    %c0_i32 = arith.constant 0 : i32
    %c0_i32_0 = arith.constant 0 : i32
    %c0_i32_1 = arith.constant 0 : i32
    return %c0_i32, %c0_i32_0 : i32, i32
  }
  func.func @transform_7(%arg0: i32, %arg1: i32) -> (i32, i32) {
    %c0_i32 = arith.constant 0 : i32
    %c0_i32_0 = arith.constant 0 : i32
    return %arg0, %c0_i32 : i32, i32
  }
}

</mosaic_0001>

<llo_original>
// kernel: tpu_custom_call.1
$region0: #{tpu_custom_call.1}
  #allocation0 [shape = 'u32[]', space=smem, size = 0x4, offset = 0x4, fixed_abs, tag = 'smem constant byte address 0x4 - core index']
  #allocation1 [shape = 'u32[144,128]{1,0:T(1,128)}', space=vmem, size = 0x12000, scoped, tag = 'internal scratch']
  %s0 = inlined_call_operand.hbm [shape: f32[16,128], index: 0, kind: input, shape index: {}]
  %s1 = inlined_call_operand.hbm [shape: f32[128,128], index: 1, kind: input, shape index: {}]
  %s2 = inlined_call_operand.vmem [shape: f32[1,128], index: 2, kind: input, shape index: {}]
  %s3 = inlined_call_operand.hbm [shape: f32[128,128], index: 3, kind: input, shape index: {}]
  %s4 = inlined_call_operand.vmem [shape: f32[1,128], index: 4, kind: input, shape index: {}]
  %s5 = inlined_call_operand.vmem [shape: f32[1,128], index: 5, kind: input, shape index: {}]
  %s6 = inlined_call_operand.vmem [shape: f32[1,128], index: 6, kind: input, shape index: {}]
  %s7 = inlined_call_operand.hbm [shape: f32[16,128], index: 7, kind: output, shape index: {}]
  %s8 = sld [smem:[#allocation0]]
  $region50: #{tpu_custom_call.1} parent=0
    _
  %s10 = ssub.s32 1, %s8
  %s11 = scalar_select 0, %s10, %s8
  $region1: #{tpu_custom_call.1} parent=0
    #allocation2 [shape = 'u8[8192]{0}', space=vmem, size = 0x2000, scoped, tag = 'input window, operand 0, single buffered']
    #allocation3 [shape = 's32[1]{0}', space=sflag, size = 0x4, scoped, tag = 'scoped memory for tpu_custom_call.1']
    #allocation4 [shape = 's32[1]{0}', space=sflag, size = 0x4, scoped, tag = 'scoped memory for tpu_custom_call.1']
    #allocation5 [shape = 'u8[65536]{0}', space=vmem, size = 0x10000, scoped, tag = 'input window, operand 1, single buffered']
    #allocation6 [shape = 's32[1]{0}', space=sflag, size = 0x4, scoped, tag = 'scoped memory for tpu_custom_call.1']
    #allocation7 [shape = 'u8[65536]{0}', space=vmem, size = 0x10000, scoped, tag = 'input window, operand 3, single buffered']
    #allocation8 [shape = 'u8[8192]{0}', space=vmem, size = 0x2000, scoped, tag = 'output window, operand 0, single buffered']
    %12 = vsyncpa [#allocation3], 0
    %13 = vsyncpa [#allocation6], 0
    %14 = vsyncpa [#allocation4], 0
    // Predicated region
    $region2: #{tpu_custom_call.1} parent=1 // pred_check
      _
    $region3: #{tpu_custom_call.1} parent=1 // pred_check_branch
      %16 = sbr.rel (0) target = $region5
    $region4: #{tpu_custom_call.1} parent=1 // pred_region
      %s18 = ssub.s32 256, 256
      %19 = vsyncadd [#allocation3], %s18
      %s20 = sshll.u32 [#allocation2], 4
      %s21 = int_to_ptr.vmem [resolvable:$true] %s20
      %26 = dma.hbm_to_vmem [thread:$0]  %s0, 256, %s21, [#allocation3], 128, 128, 8
    $region5: #{tpu_custom_call.1} parent=1 // pred_fallthru
      _
    // Predicated region
    $region6: #{tpu_custom_call.1} parent=1 // pred_check
      _
    $region7: #{tpu_custom_call.1} parent=1 // pred_check_branch
      %28 = sbr.rel (0) target = $region9
    $region8: #{tpu_custom_call.1} parent=1 // pred_region
      %s30 = ssub.s32 2048, 2048
      %31 = vsyncadd [#allocation6], %s30
      %s32 = sshll.u32 [#allocation5], 4
      %s33 = int_to_ptr.vmem [resolvable:$true] %s32
      %38 = dma.hbm_to_vmem [thread:$0]  %s1, 2048, %s33, [#allocation6], 128, 128, 8
    $region9: #{tpu_custom_call.1} parent=1 // pred_fallthru
      _
    // Predicated region
    $region10: #{tpu_custom_call.1} parent=1 // pred_check
      _
    $region11: #{tpu_custom_call.1} parent=1 // pred_check_branch
      %40 = sbr.rel (0) target = $region13
    $region12: #{tpu_custom_call.1} parent=1 // pred_region
      _
    $region13: #{tpu_custom_call.1} parent=1 // pred_fallthru
      _
    // Predicated region
    $region14: #{tpu_custom_call.1} parent=1 // pred_check
      _
    $region15: #{tpu_custom_call.1} parent=1 // pred_check_branch
      %42 = sbr.rel (0) target = $region17
    $region16: #{tpu_custom_call.1} parent=1 // pred_region
      %s44 = ssub.s32 2048, 2048
      %45 = vsyncadd [#allocation6], %s44
      %s46 = sshll.u32 [#allocation7], 4
      %s47 = int_to_ptr.vmem [resolvable:$true] %s46
      %52 = dma.hbm_to_vmem [thread:$0]  %s3, 2048, %s47, [#allocation6], 128, 128, 8
    $region17: #{tpu_custom_call.1} parent=1 // pred_fallthru
      _
    // Predicated region
    $region18: #{tpu_custom_call.1} parent=1 // pred_check
      _
    $region19: #{tpu_custom_call.1} parent=1 // pred_check_branch
      %54 = sbr.rel (0) target = $region21
    $region20: #{tpu_custom_call.1} parent=1 // pred_region
      _
    $region21: #{tpu_custom_call.1} parent=1 // pred_fallthru
      _
    // Predicated region
    $region22: #{tpu_custom_call.1} parent=1 // pred_check
      _
    $region23: #{tpu_custom_call.1} parent=1 // pred_check_branch
      %56 = sbr.rel (0) target = $region25
    $region24: #{tpu_custom_call.1} parent=1 // pred_region
      _
    $region25: #{tpu_custom_call.1} parent=1 // pred_fallthru
      _
    // Predicated region
    $region26: #{tpu_custom_call.1} parent=1 // pred_check
      _
    $region27: #{tpu_custom_call.1} parent=1 // pred_check_branch
      %58 = sbr.rel (0) target = $region29
    $region28: #{tpu_custom_call.1} parent=1 // pred_region
      _
    $region29: #{tpu_custom_call.1} parent=1 // pred_fallthru
      _
    // Predicated region
    $region30: #{tpu_custom_call.1} parent=1 // pred_check
      _
    $region31: #{tpu_custom_call.1} parent=1 // pred_check_branch
      %60 = sbr.rel (0) target = $region33
    $region32: #{tpu_custom_call.1} parent=1 // pred_region
      %61 = dma.done [#allocation3], 256
    $region33: #{tpu_custom_call.1} parent=1 // pred_fallthru
      _
    // Predicated region
    $region34: #{tpu_custom_call.1} parent=1 // pred_check
      _
    $region35: #{tpu_custom_call.1} parent=1 // pred_check_branch
      %63 = sbr.rel (0) target = $region37
    $region36: #{tpu_custom_call.1} parent=1 // pred_region
      %64 = dma.done [#allocation6], 2048
    $region37: #{tpu_custom_call.1} parent=1 // pred_fallthru
      _
    // Predicated region
    $region38: #{tpu_custom_call.1} parent=1 // pred_check
      _
    $region39: #{tpu_custom_call.1} parent=1 // pred_check_branch
      %66 = sbr.rel (0) target = $region41
    $region40: #{tpu_custom_call.1} parent=1 // pred_region
      %67 = dma.done [#allocation6], 2048
    $region41: #{tpu_custom_call.1} parent=1 // pred_fallthru
      _
    %v68 = vld [vmem:[#allocation2] sm:$0xff]
    %v69 = vld [vmem:[#allocation2 + $0x8] sm:$0xff]
    %v70 = vld [vmem:[#allocation5] sm:$0xff]
    %v71 = vld [vmem:[#allocation5 + $0x8] sm:$0xff]
    %v72 = vld [vmem:[#allocation5 + $0x10] sm:$0xff]
    %v73 = vld [vmem:[#allocation5 + $0x18] sm:$0xff]
    %v74 = vld [vmem:[#allocation5 + $0x20] sm:$0xff]
    %v75 = vld [vmem:[#allocation5 + $0x28] sm:$0xff]
    %v76 = vld [vmem:[#allocation5 + $0x30] sm:$0xff]
    %v77 = vld [vmem:[#allocation5 + $0x38] sm:$0xff]
    %v78 = vld [vmem:[#allocation5 + $0x40] sm:$0xff]
    %v79 = vld [vmem:[#allocation5 + $0x48] sm:$0xff]
    %v80 = vld [vmem:[#allocation5 + $0x50] sm:$0xff]
    %v81 = vld [vmem:[#allocation5 + $0x58] sm:$0xff]
    %v82 = vld [vmem:[#allocation5 + $0x60] sm:$0xff]
    %v83 = vld [vmem:[#allocation5 + $0x68] sm:$0xff]
    %v84 = vld [vmem:[#allocation5 + $0x70] sm:$0xff]
    %v85 = vld [vmem:[#allocation5 + $0x78] sm:$0xff]
    %v86 = vld [vmem:[%s2] sm:$0x1]
    %v88 = vlaneseq
    %v89 = vshrl.u32 %v88, 7
    %v90 = vsub.s32 0, %v89
    %v91 = vrot.slane %v86, %v90
    %93 = vmatprep.subr.mxu0 0.0
    %94 = vmatpush1.msra.mxu0 %v85
    %95 = vmatprep.subr.mxu0 0.0
    %96 = vmatpush1.msra.mxu0 %v84
    %97 = vmatprep.subr.mxu0 0.0
    %98 = vmatpush1.msra.mxu0 %v83
    %99 = vmatprep.subr.mxu0 0.0
    %100 = vmatpush1.msra.mxu0 %v82
    %101 = vmatprep.subr.mxu0 0.0
    %102 = vmatpush1.msra.mxu0 %v81
    %103 = vmatprep.subr.mxu0 0.0
    %104 = vmatpush1.msra.mxu0 %v80
    %105 = vmatprep.subr.mxu0 0.0
    %106 = vmatpush1.msra.mxu0 %v79
    %107 = vmatprep.subr.mxu0 0.0
    %108 = vmatpush1.msra.mxu0 %v78
    %109 = vmatprep.subr.mxu0 0.0
    %110 = vmatpush1.msra.mxu0 %v77
    %111 = vmatprep.subr.mxu0 0.0
    %112 = vmatpush1.msra.mxu0 %v76
    %113 = vmatprep.subr.mxu0 0.0
    %114 = vmatpush1.msra.mxu0 %v75
    %115 = vmatprep.subr.mxu0 0.0
    %116 = vmatpush1.msra.mxu0 %v74
    %117 = vmatprep.subr.mxu0 0.0
    %118 = vmatpush1.msra.mxu0 %v73
    %119 = vmatprep.subr.mxu0 0.0
    %120 = vmatpush1.msra.mxu0 %v72
    %121 = vmatprep.subr.mxu0 0.0
    %122 = vmatpush1.msra.mxu0 %v71
    %123 = vmatprep.subr.mxu0 0.0
    %124 = vmatpush1.msra.mxu0 %v70
    %125 = vmatprep.subr.mxu0 0.0
    %126 = vmatpush2.msra.mxu0 0.0
    %127 = vmatprep.subr.mxu0 0.0
    %128 = vmatpush2.msra.mxu0 0.0
    %129 = vmatprep.subr.mxu0 0.0
    %130 = vmatpush2.msra.mxu0 0.0
    %131 = vmatprep.subr.mxu0 0.0
    %132 = vmatpush2.msra.mxu0 0.0
    %133 = vmatprep.subr.mxu0 0.0
    %134 = vmatpush2.msra.mxu0 0.0
    %135 = vmatprep.subr.mxu0 0.0
    %136 = vmatpush2.msra.mxu0 0.0
    %137 = vmatprep.subr.mxu0 0.0
    %138 = vmatpush2.msra.mxu0 0.0
    %139 = vmatprep.subr.mxu0 0.0
    %140 = vmatpush2.msra.mxu0 0.0
    %141 = vmatprep.subr.mxu0 0.0
    %142 = vmatpush2.msra.mxu0 0.0
    %143 = vmatprep.subr.mxu0 0.0
    %144 = vmatpush2.msra.mxu0 0.0
    %145 = vmatprep.subr.mxu0 0.0
    %146 = vmatpush2.msra.mxu0 0.0
    %147 = vmatprep.subr.mxu0 0.0
    %148 = vmatpush2.msra.mxu0 0.0
    %149 = vmatprep.subr.mxu0 0.0
    %150 = vmatpush2.msra.mxu0 0.0
    %151 = vmatprep.subr.mxu0 0.0
    %152 = vmatpush2.msra.mxu0 0.0
    %153 = vmatprep.subr.mxu0 0.0
    %154 = vmatpush2.msra.mxu0 0.0
    %155 = vmatprep.subr.mxu0 0.0
    %156 = vmatpush2.msra.mxu0 0.0
    %157 = vmatprep.mubr.f32.mxu0 0.0
    %158 = vmatmul.mubr.f32.gmra.mxu0 %v68
    %v159 = vpop.f32.mrf.mxu0
    %v160 = vadd.f32 %v91, %v159
    %v161 = vpop.f32.mrf.mxu0
    %162 = vmatprep.mubr.f32.mxu0 0.0
    %163 = vmatmul.mubr.f32.gmra.mxu0 %v69
    %v164 = vpop.f32.mrf.mxu0
    %v165 = vadd.f32 %v91, %v164
    %v166 = vpop.f32.mrf.mxu0
    %167 = vdwg.mxu0
    %v168 = vmax.f32 %v160, 0.0
    %v169 = vmax.f32 %v165, 0.0
    %v170 = vld [vmem:[#allocation7] sm:$0xff]
    %v171 = vld [vmem:[#allocation7 + $0x8] sm:$0xff]
    %v172 = vld [vmem:[#allocation7 + $0x10] sm:$0xff]
    %v173 = vld [vmem:[#allocation7 + $0x18] sm:$0xff]
    %v174 = vld [vmem:[#allocation7 + $0x20] sm:$0xff]
    %v175 = vld [vmem:[#allocation7 + $0x28] sm:$0xff]
    %v176 = vld [vmem:[#allocation7 + $0x30] sm:$0xff]
    %v177 = vld [vmem:[#allocation7 + $0x38] sm:$0xff]
    %v178 = vld [vmem:[#allocation7 + $0x40] sm:$0xff]
    %v179 = vld [vmem:[#allocation7 + $0x48] sm:$0xff]
    %v180 = vld [vmem:[#allocation7 + $0x50] sm:$0xff]
    %v181 = vld [vmem:[#allocation7 + $0x58] sm:$0xff]
    %v182 = vld [vmem:[#allocation7 + $0x60] sm:$0xff]
    %v183 = vld [vmem:[#allocation7 + $0x68] sm:$0xff]
    %v184 = vld [vmem:[#allocation7 + $0x70] sm:$0xff]
    %v185 = vld [vmem:[#allocation7 + $0x78] sm:$0xff]
    %v186 = vld [vmem:[%s4] sm:$0x1]
    %v187 = vld [vmem:[%s5] sm:$0x1]
    %v188 = vld [vmem:[%s6] sm:$0x1]
    %v190 = vlaneseq
    %v191 = vshrl.u32 %v190, 7
    %v192 = vsub.s32 0, %v191
    %v193 = vrot.slane %v186, %v192
    %195 = vmatprep.subr.mxu0 0.0
    %196 = vmatpush1.msra.mxu0 %v185
    %197 = vmatprep.subr.mxu0 0.0
    %198 = vmatpush1.msra.mxu0 %v184
    %199 = vmatprep.subr.mxu0 0.0
    %200 = vmatpush1.msra.mxu0 %v183
    %201 = vmatprep.subr.mxu0 0.0
    %202 = vmatpush1.msra.mxu0 %v182
    %203 = vmatprep.subr.mxu0 0.0
    %204 = vmatpush1.msra.mxu0 %v181
    %205 = vmatprep.subr.mxu0 0.0
    %206 = vmatpush1.msra.mxu0 %v180
    %207 = vmatprep.subr.mxu0 0.0
    %208 = vmatpush1.msra.mxu0 %v179
    %209 = vmatprep.subr.mxu0 0.0
    %210 = vmatpush1.msra.mxu0 %v178
    %211 = vmatprep.subr.mxu0 0.0
    %212 = vmatpush1.msra.mxu0 %v177
    %213 = vmatprep.subr.mxu0 0.0
    %214 = vmatpush1.msra.mxu0 %v176
    %215 = vmatprep.subr.mxu0 0.0
    %216 = vmatpush1.msra.mxu0 %v175
    %217 = vmatprep.subr.mxu0 0.0
    %218 = vmatpush1.msra.mxu0 %v174
    %219 = vmatprep.subr.mxu0 0.0
    %220 = vmatpush1.msra.mxu0 %v173
    %221 = vmatprep.subr.mxu0 0.0
    %222 = vmatpush1.msra.mxu0 %v172
    %223 = vmatprep.subr.mxu0 0.0
    %224 = vmatpush1.msra.mxu0 %v171
    %225 = vmatprep.subr.mxu0 0.0
    %226 = vmatpush1.msra.mxu0 %v170
    %227 = vmatprep.subr.mxu0 0.0
    %228 = vmatpush2.msra.mxu0 0.0
    %229 = vmatprep.subr.mxu0 0.0
    %230 = vmatpush2.msra.mxu0 0.0
    %231 = vmatprep.subr.mxu0 0.0
    %232 = vmatpush2.msra.mxu0 0.0
    %233 = vmatprep.subr.mxu0 0.0
    %234 = vmatpush2.msra.mxu0 0.0
    %235 = vmatprep.subr.mxu0 0.0
    %236 = vmatpush2.msra.mxu0 0.0
    %237 = vmatprep.subr.mxu0 0.0
    %238 = vmatpush2.msra.mxu0 0.0
    %239 = vmatprep.subr.mxu0 0.0
    %240 = vmatpush2.msra.mxu0 0.0
    %241 = vmatprep.subr.mxu0 0.0
    %242 = vmatpush2.msra.mxu0 0.0
    %243 = vmatprep.subr.mxu0 0.0
    %244 = vmatpush2.msra.mxu0 0.0
    %245 = vmatprep.subr.mxu0 0.0
    %246 = vmatpush2.msra.mxu0 0.0
    %247 = vmatprep.subr.mxu0 0.0
    %248 = vmatpush2.msra.mxu0 0.0
    %249 = vmatprep.subr.mxu0 0.0
    %250 = vmatpush2.msra.mxu0 0.0
    %251 = vmatprep.subr.mxu0 0.0
    %252 = vmatpush2.msra.mxu0 0.0
    %253 = vmatprep.subr.mxu0 0.0
    %254 = vmatpush2.msra.mxu0 0.0
    %255 = vmatprep.subr.mxu0 0.0
    %256 = vmatpush2.msra.mxu0 0.0
    %257 = vmatprep.subr.mxu0 0.0
    %258 = vmatpush2.msra.mxu0 0.0
    %259 = vmatprep.mubr.f32.mxu0 0.0
    %260 = vmatmul.mubr.f32.gmra.mxu0 %v168
    %v261 = vpop.f32.mrf.mxu0
    %v262 = vadd.f32 %v193, %v261
    %v263 = vpop.f32.mrf.mxu0
    %264 = vmatprep.mubr.f32.mxu0 0.0
    %265 = vmatmul.mubr.f32.gmra.mxu0 %v169
    %v266 = vpop.f32.mrf.mxu0
    %v267 = vadd.f32 %v193, %v266
    %v268 = vpop.f32.mrf.mxu0
    %269 = vdwg.mxu0
    %v270 = vadd.f32 %v262, %v68
    %v271 = vadd.f32 %v267, %v69
    %272 = vadd.xlane.f32.xlu0 %v270
    %v273 = vpop.xlane.xlu0 %272
    %274 = vadd.xlane.f32.xlu0 %v271
    %v275 = vpop.xlane.xlu0 %274
    %v276 = vmul.f32 %v273, 0.03125
    %v277 = vmul.f32 %v275, 0.03125
    %v278 = vsub.f32 %v270, %v276
    %v279 = vsub.f32 %v271, %v277
    %v280 = vlaneseq
    %v281 = vand.u32 %v280, 127
    %vm282 = vcmp.lt.s32.totalorder %v281, 32
    %v283 = vsel %vm282, 1, 0
    %v284 = vcvt.s32.f32 %v283
    %v285 = vmul.f32 %v278, %v284
    %v286 = vmul.f32 %v279, %v284
    %v287 = vmul.f32 %v285, %v285
    %v288 = vmul.f32 %v286, %v286
    %289 = vadd.xlane.f32.xlu0 %v287
    %v290 = vpop.xlane.xlu0 %289
    %291 = vadd.xlane.f32.xlu0 %v288
    %v292 = vpop.xlane.xlu0 %291
    %v293 = vmul.f32 %v290, 0.03125
    %v294 = vmul.f32 %v292, 0.03125
    %v295 = vadd.f32 %v293, 1e-06
    %v296 = vadd.f32 %v294, 1e-06
    %v297 = vrsqrt.pop %v295
    %v298 = vrsqrt.pop %v296
    %v299 = vmul.f32 %v285, %v297
    %v300 = vmul.f32 %v286, %v298
    %v302 = vlaneseq
    %v303 = vshrl.u32 %v302, 7
    %v304 = vsub.s32 0, %v303
    %v305 = vrot.slane %v187, %v304
    %v307 = vmul.f32 %v299, %v305
    %v308 = vmul.f32 %v300, %v305
    %v310 = vlaneseq
    %v311 = vshrl.u32 %v310, 7
    %v312 = vsub.s32 0, %v311
    %v313 = vrot.slane %v188, %v312
    %v315 = vadd.f32 %v307, %v313
    %v316 = vadd.f32 %v308, %v313
    %317 = vst [vmem:[#allocation8] sm:$0xff] %v315
    %318 = vst [vmem:[#allocation8 + $0x8] sm:$0xff] %v316
    // Predicated region
    $region42: #{tpu_custom_call.1} parent=1 // pred_check
      _
    $region43: #{tpu_custom_call.1} parent=1 // pred_check_branch
      %320 = sbr.rel (0) target = $region45
    $region44: #{tpu_custom_call.1} parent=1 // pred_region
      %s322 = ssub.s32 256, 256
      %323 = vsyncadd [#allocation4], %s322
      %s324 = sshll.u32 [#allocation8], 4
      %s325 = int_to_ptr.vmem [resolvable:$true] %s324
      %330 = dma.vmem_to_hbm [thread:$0]  %s325, 256, %s7, [#allocation4], 128, 128, 8
    $region45: #{tpu_custom_call.1} parent=1 // pred_fallthru
      _
    // Predicated region
    $region46: #{tpu_custom_call.1} parent=1 // pred_check
      _
    $region47: #{tpu_custom_call.1} parent=1 // pred_check_branch
      %332 = sbr.rel (0) target = $region49
    $region48: #{tpu_custom_call.1} parent=1 // pred_region
      %333 = dma.done [#allocation4], 256
    $region49: #{tpu_custom_call.1} parent=1 // pred_fallthru
      _
    %334 = vsyncpa [#allocation3], 1
    %335 = vsyncpa [#allocation6], 1
    %336 = vsyncpa [#allocation4], 1

// kernel: tpu_custom_call.1
$region0: #{tpu_custom_call.1}
  #allocation0 [shape = 'u32[]', space=smem, size = 0x4, offset = 0x4, fixed_abs, tag = 'smem constant byte address 0x4 - core index']
  #allocation1 [shape = 'u32[144,128]{1,0:T(1,128)}', space=vmem, size = 0x12000, scoped, tag = 'internal scratch']
  %s0 = inlined_call_operand.hbm [shape: f32[16,128], index: 0, kind: input, shape index: {}]
  %s1 = inlined_call_operand.hbm [shape: f32[128,128], index: 1, kind: input, shape index: {}]
  %s2 = inlined_call_operand.vmem [shape: f32[1,128], index: 2, kind: input, shape index: {}]
  %s3 = inlined_call_operand.hbm [shape: f32[128,128], index: 3, kind: input, shape index: {}]
  %s4 = inlined_call_operand.vmem [shape: f32[1,128], index: 4, kind: input, shape index: {}]
  %s5 = inlined_call_operand.vmem [shape: f32[1,128], index: 5, kind: input, shape index: {}]
  %s6 = inlined_call_operand.vmem [shape: f32[1,128], index: 6, kind: input, shape index: {}]
  %s7 = inlined_call_operand.hbm [shape: f32[16,128], index: 7, kind: output, shape index: {}]
  %s8 = sld [smem:[#allocation0]]
  $region50: #{tpu_custom_call.1} parent=0
    _
  %s10 = ssub.s32 1, %s8
  %s11 = scalar_select 0, %s10, %s8
  $region1: #{tpu_custom_call.1} parent=0
    #allocation2 [shape = 'u8[8192]{0}', space=vmem, size = 0x2000, scoped, tag = 'input window, operand 0, single buffered']
    #allocation3 [shape = 's32[1]{0}', space=sflag, size = 0x4, scoped, tag = 'scoped memory for tpu_custom_call.1']
    #allocation4 [shape = 's32[1]{0}', space=sflag, size = 0x4, scoped, tag = 'scoped memory for tpu_custom_call.1']
    #allocation5 [shape = 'u8[65536]{0}', space=vmem, size = 0x10000, scoped, tag = 'input window, operand 1, single buffered']
    #allocation6 [shape = 's32[1]{0}', space=sflag, size = 0x4, scoped, tag = 'scoped memory for tpu_custom_call.1']
    #allocation7 [shape = 'u8[65536]{0}', space=vmem, size = 0x10000, scoped, tag = 'input window, operand 3, single buffered']
    #allocation8 [shape = 'u8[8192]{0}', space=vmem, size = 0x2000, scoped, tag = 'output window, operand 0, single buffered']
    %12 = vsyncpa [#allocation3], 0
    %13 = vsyncpa [#allocation6], 0
    %14 = vsyncpa [#allocation4], 0
    // Predicated region
    $region2: #{tpu_custom_call.1} parent=1 // pred_check
      _
    $region3: #{tpu_custom_call.1} parent=1 // pred_check_branch
      %16 = sbr.rel (0) target = $region5
    $region4: #{tpu_custom_call.1} parent=1 // pred_region
      %s18 = ssub.s32 256, 256
      %19 = vsyncadd [#allocation3], %s18
      %s20 = sshll.u32 [#allocation2], 4
      %s21 = int_to_ptr.vmem [resolvable:$true] %s20
      %26 = dma.hbm_to_vmem [thread:$0]  %s0, 256, %s21, [#allocation3], 128, 128, 8
    $region5: #{tpu_custom_call.1} parent=1 // pred_fallthru
      _
    // Predicated region
    $region6: #{tpu_custom_call.1} parent=1 // pred_check
      _
    $region7: #{tpu_custom_call.1} parent=1 // pred_check_branch
      %28 = sbr.rel (0) target = $region9
    $region8: #{tpu_custom_call.1} parent=1 // pred_region
      %s30 = ssub.s32 2048, 2048
      %31 = vsyncadd [#allocation6], %s30
      %s32 = sshll.u32 [#allocation5], 4
      %s33 = int_to_ptr.vmem [resolvable:$true] %s32
      %38 = dma.hbm_to_vmem [thread:$0]  %s1, 2048, %s33, [#allocation6], 128, 128, 8
    $region9: #{tpu_custom_call.1} parent=1 // pred_fallthru
      _
    // Predicated region
    $region10: #{tpu_custom_call.1} parent=1 // pred_check
      _
    $region11: #{tpu_custom_call.1} parent=1 // pred_check_branch
      %40 = sbr.rel (0) target = $region13
    $region12: #{tpu_custom_call.1} parent=1 // pred_region
      _
    $region13: #{tpu_custom_call.1} parent=1 // pred_fallthru
      _
    // Predicated region
    $region14: #{tpu_custom_call.1} parent=1 // pred_check
      _
    $region15: #{tpu_custom_call.1} parent=1 // pred_check_branch
      %42 = sbr.rel (0) target = $region17
    $region16: #{tpu_custom_call.1} parent=1 // pred_region
      %s44 = ssub.s32 2048, 2048
      %45 = vsyncadd [#allocation6], %s44
      %s46 = sshll.u32 [#allocation7], 4
      %s47 = int_to_ptr.vmem [resolvable:$true] %s46
      %52 = dma.hbm_to_vmem [thread:$0]  %s3, 2048, %s47, [#allocation6], 128, 128, 8
    $region17: #{tpu_custom_call.1} parent=1 // pred_fallthru
      _
    // Predicated region
    $region18: #{tpu_custom_call.1} parent=1 // pred_check
      _
    $region19: #{tpu_custom_call.1} parent=1 // pred_check_branch
      %54 = sbr.rel (0) target = $region21
    $region20: #{tpu_custom_call.1} parent=1 // pred_region
      _
    $region21: #{tpu_custom_call.1} parent=1 // pred_fallthru
      _
    // Predicated region
    $region22: #{tpu_custom_call.1} parent=1 // pred_check
      _
    $region23: #{tpu_custom_call.1} parent=1 // pred_check_branch
      %56 = sbr.rel (0) target = $region25
    $region24: #{tpu_custom_call.1} parent=1 // pred_region
      _
    $region25: #{tpu_custom_call.1} parent=1 // pred_fallthru
      _
    // Predicated region
    $region26: #{tpu_custom_call.1} parent=1 // pred_check
      _
    $region27: #{tpu_custom_call.1} parent=1 // pred_check_branch
      %58 = sbr.rel (0) target = $region29
    $region28: #{tpu_custom_call.1} parent=1 // pred_region
      _
    $region29: #{tpu_custom_call.1} parent=1 // pred_fallthru
      _
    // Predicated region
    $region30: #{tpu_custom_call.1} parent=1 // pred_check
      _
    $region31: #{tpu_custom_call.1} parent=1 // pred_check_branch
      %60 = sbr.rel (0) target = $region33
    $region32: #{tpu_custom_call.1} parent=1 // pred_region
      %61 = dma.done [#allocation3], 256
    $region33: #{tpu_custom_call.1} parent=1 // pred_fallthru
      _
    // Predicated region
    $region34: #{tpu_custom_call.1} parent=1 // pred_check
      _
    $region35: #{tpu_custom_call.1} parent=1 // pred_check_branch
      %63 = sbr.rel (0) target = $region37
    $region36: #{tpu_custom_call.1} parent=1 // pred_region
      %64 = dma.done [#allocation6], 2048
    $region37: #{tpu_custom_call.1} parent=1 // pred_fallthru
      _
    // Predicated region
    $region38: #{tpu_custom_call.1} parent=1 // pred_check
      _
    $region39: #{tpu_custom_call.1} parent=1 // pred_check_branch
      %66 = sbr.rel (0) target = $region41
    $region40: #{tpu_custom_call.1} parent=1 // pred_region
      %67 = dma.done [#allocation6], 2048
    $region41: #{tpu_custom_call.1} parent=1 // pred_fallthru
      _
    %v68 = vld [vmem:[#allocation2] sm:$0xff]
    %v69 = vld [vmem:[#allocation2 + $0x8] sm:$0xff]
    %v70 = vld [vmem:[#allocation5] sm:$0xff]
    %v71 = vld [vmem:[#allocation5 + $0x8] sm:$0xff]
    %v72 = vld [vmem:[#allocation5 + $0x10] sm:$0xff]
    %v73 = vld [vmem:[#allocation5 + $0x18] sm:$0xff]
    %v74 = vld [vmem:[#allocation5 + $0x20] sm:$0xff]
    %v75 = vld [vmem:[#allocation5 + $0x28] sm:$0xff]
    %v76 = vld [vmem:[#allocation5 + $0x30] sm:$0xff]
    %v77 = vld [vmem:[#allocation5 + $0x38] sm:$0xff]
    %v78 = vld [vmem:[#allocation5 + $0x40] sm:$0xff]
    %v79 = vld [vmem:[#allocation5 + $0x48] sm:$0xff]
    %v80 = vld [vmem:[#allocation5 + $0x50] sm:$0xff]
    %v81 = vld [vmem:[#allocation5 + $0x58] sm:$0xff]
    %v82 = vld [vmem:[#allocation5 + $0x60] sm:$0xff]
    %v83 = vld [vmem:[#allocation5 + $0x68] sm:$0xff]
    %v84 = vld [vmem:[#allocation5 + $0x70] sm:$0xff]
    %v85 = vld [vmem:[#allocation5 + $0x78] sm:$0xff]
    %v86 = vld [vmem:[%s2] sm:$0x1]
    %v88 = vlaneseq
    %v89 = vshrl.u32 %v88, 7
    %v90 = vsub.s32 0, %v89
    %v91 = vrot.slane %v86, %v90
    %93 = vmatprep.subr.mxu0 0.0
    %94 = vmatpush1.msra.mxu0 %v85
    %95 = vmatprep.subr.mxu0 0.0
    %96 = vmatpush1.msra.mxu0 %v84
    %97 = vmatprep.subr.mxu0 0.0
    %98 = vmatpush1.msra.mxu0 %v83
    %99 = vmatprep.subr.mxu0 0.0
    %100 = vmatpush1.msra.mxu0 %v82
    %101 = vmatprep.subr.mxu0 0.0
    %102 = vmatpush1.msra.mxu0 %v81
    %103 = vmatprep.subr.mxu0 0.0
    %104 = vmatpush1.msra.mxu0 %v80
    %105 = vmatprep.subr.mxu0 0.0
    %106 = vmatpush1.msra.mxu0 %v79
    %107 = vmatprep.subr.mxu0 0.0
    %108 = vmatpush1.msra.mxu0 %v78
    %109 = vmatprep.subr.mxu0 0.0
    %110 = vmatpush1.msra.mxu0 %v77
    %111 = vmatprep.subr.mxu0 0.0
    %112 = vmatpush1.msra.mxu0 %v76
    %113 = vmatprep.subr.mxu0 0.0
    %114 = vmatpush1.msra.mxu0 %v75
    %115 = vmatprep.subr.mxu0 0.0
    %116 = vmatpush1.msra.mxu0 %v74
    %117 = vmatprep.subr.mxu0 0.0
    %118 = vmatpush1.msra.mxu0 %v73
    %119 = vmatprep.subr.mxu0 0.0
    %120 = vmatpush1.msra.mxu0 %v72
    %121 = vmatprep.subr.mxu0 0.0
    %122 = vmatpush1.msra.mxu0 %v71
    %123 = vmatprep.subr.mxu0 0.0
    %124 = vmatpush1.msra.mxu0 %v70
    %125 = vmatprep.subr.mxu0 0.0
    %126 = vmatpush2.msra.mxu0 0.0
    %127 = vmatprep.subr.mxu0 0.0
    %128 = vmatpush2.msra.mxu0 0.0
    %129 = vmatprep.subr.mxu0 0.0
    %130 = vmatpush2.msra.mxu0 0.0
    %131 = vmatprep.subr.mxu0 0.0
    %132 = vmatpush2.msra.mxu0 0.0
    %133 = vmatprep.subr.mxu0 0.0
    %134 = vmatpush2.msra.mxu0 0.0
    %135 = vmatprep.subr.mxu0 0.0
    %136 = vmatpush2.msra.mxu0 0.0
    %137 = vmatprep.subr.mxu0 0.0
    %138 = vmatpush2.msra.mxu0 0.0
    %139 = vmatprep.subr.mxu0 0.0
    %140 = vmatpush2.msra.mxu0 0.0
    %141 = vmatprep.subr.mxu0 0.0
    %142 = vmatpush2.msra.mxu0 0.0
    %143 = vmatprep.subr.mxu0 0.0
    %144 = vmatpush2.msra.mxu0 0.0
    %145 = vmatprep.subr.mxu0 0.0
    %146 = vmatpush2.msra.mxu0 0.0
    %147 = vmatprep.subr.mxu0 0.0
    %148 = vmatpush2.msra.mxu0 0.0
    %149 = vmatprep.subr.mxu0 0.0
    %150 = vmatpush2.msra.mxu0 0.0
    %151 = vmatprep.subr.mxu0 0.0
    %152 = vmatpush2.msra.mxu0 0.0
    %153 = vmatprep.subr.mxu0 0.0
    %154 = vmatpush2.msra.mxu0 0.0
    %155 = vmatprep.subr.mxu0 0.0
    %156 = vmatpush2.msra.mxu0 0.0
    %157 = vmatprep.mubr.f32.mxu0 0.0
    %158 = vmatmul.mubr.f32.gmra.mxu0 %v68
    %v159 = vpop.f32.mrf.mxu0
    %v160 = vadd.f32 %v91, %v159
    %v161 = vpop.f32.mrf.mxu0
    %162 = vmatprep.mubr.f32.mxu0 0.0
    %163 = vmatmul.mubr.f32.gmra.mxu0 %v69
    %v164 = vpop.f32.mrf.mxu0
    %v165 = vadd.f32 %v91, %v164
    %v166 = vpop.f32.mrf.mxu0
    %167 = vdwg.mxu0
    %v168 = vmax.f32 %v160, 0.0
    %v169 = vmax.f32 %v165, 0.0
    %v170 = vld [vmem:[#allocation7] sm:$0xff]
    %v171 = vld [vmem:[#allocation7 + $0x8] sm:$0xff]
    %v172 = vld [vmem:[#allocation7 + $0x10] sm:$0xff]
    %v173 = vld [vmem:[#allocation7 + $0x18] sm:$0xff]
    %v174 = vld [vmem:[#allocation7 + $0x20] sm:$0xff]
    %v175 = vld [vmem:[#allocation7 + $0x28] sm:$0xff]
    %v176 = vld [vmem:[#allocation7 + $0x30] sm:$0xff]
    %v177 = vld [vmem:[#allocation7 + $0x38] sm:$0xff]
    %v178 = vld [vmem:[#allocation7 + $0x40] sm:$0xff]
    %v179 = vld [vmem:[#allocation7 + $0x48] sm:$0xff]
    %v180 = vld [vmem:[#allocation7 + $0x50] sm:$0xff]
    %v181 = vld [vmem:[#allocation7 + $0x58] sm:$0xff]
    %v182 = vld [vmem:[#allocation7 + $0x60] sm:$0xff]
    %v183 = vld [vmem:[#allocation7 + $0x68] sm:$0xff]
    %v184 = vld [vmem:[#allocation7 + $0x70] sm:$0xff]
    %v185 = vld [vmem:[#allocation7 + $0x78] sm:$0xff]
    %v186 = vld [vmem:[%s4] sm:$0x1]
    %v187 = vld [vmem:[%s5] sm:$0x1]
    %v188 = vld [vmem:[%s6] sm:$0x1]
    %v190 = vlaneseq
    %v191 = vshrl.u32 %v190, 7
    %v192 = vsub.s32 0, %v191
    %v193 = vrot.slane %v186, %v192
    %195 = vmatprep.subr.mxu0 0.0
    %196 = vmatpush1.msra.mxu0 %v185
    %197 = vmatprep.subr.mxu0 0.0
    %198 = vmatpush1.msra.mxu0 %v184
    %199 = vmatprep.subr.mxu0 0.0
    %200 = vmatpush1.msra.mxu0 %v183
    %201 = vmatprep.subr.mxu0 0.0
    %202 = vmatpush1.msra.mxu0 %v182
    %203 = vmatprep.subr.mxu0 0.0
    %204 = vmatpush1.msra.mxu0 %v181
    %205 = vmatprep.subr.mxu0 0.0
    %206 = vmatpush1.msra.mxu0 %v180
    %207 = vmatprep.subr.mxu0 0.0
    %208 = vmatpush1.msra.mxu0 %v179
    %209 = vmatprep.subr.mxu0 0.0
    %210 = vmatpush1.msra.mxu0 %v178
    %211 = vmatprep.subr.mxu0 0.0
    %212 = vmatpush1.msra.mxu0 %v177
    %213 = vmatprep.subr.mxu0 0.0
    %214 = vmatpush1.msra.mxu0 %v176
    %215 = vmatprep.subr.mxu0 0.0
    %216 = vmatpush1.msra.mxu0 %v175
    %217 = vmatprep.subr.mxu0 0.0
    %218 = vmatpush1.msra.mxu0 %v174
    %219 = vmatprep.subr.mxu0 0.0
    %220 = vmatpush1.msra.mxu0 %v173
    %221 = vmatprep.subr.mxu0 0.0
    %222 = vmatpush1.msra.mxu0 %v172
    %223 = vmatprep.subr.mxu0 0.0
    %224 = vmatpush1.msra.mxu0 %v171
    %225 = vmatprep.subr.mxu0 0.0
    %226 = vmatpush1.msra.mxu0 %v170
    %227 = vmatprep.subr.mxu0 0.0
    %228 = vmatpush2.msra.mxu0 0.0
    %229 = vmatprep.subr.mxu0 0.0
    %230 = vmatpush2.msra.mxu0 0.0
    %231 = vmatprep.subr.mxu0 0.0
    %232 = vmatpush2.msra.mxu0 0.0
    %233 = vmatprep.subr.mxu0 0.0
    %234 = vmatpush2.msra.mxu0 0.0
    %235 = vmatprep.subr.mxu0 0.0
    %236 = vmatpush2.msra.mxu0 0.0
    %237 = vmatprep.subr.mxu0 0.0
    %238 = vmatpush2.msra.mxu0 0.0
    %239 = vmatprep.subr.mxu0 0.0
    %240 = vmatpush2.msra.mxu0 0.0
    %241 = vmatprep.subr.mxu0 0.0
    %242 = vmatpush2.msra.mxu0 0.0
    %243 = vmatprep.subr.mxu0 0.0
    %244 = vmatpush2.msra.mxu0 0.0
    %245 = vmatprep.subr.mxu0 0.0
    %246 = vmatpush2.msra.mxu0 0.0
    %247 = vmatprep.subr.mxu0 0.0
    %248 = vmatpush2.msra.mxu0 0.0
    %249 = vmatprep.subr.mxu0 0.0
    %250 = vmatpush2.msra.mxu0 0.0
    %251 = vmatprep.subr.mxu0 0.0
    %252 = vmatpush2.msra.mxu0 0.0
    %253 = vmatprep.subr.mxu0 0.0
    %254 = vmatpush2.msra.mxu0 0.0
    %255 = vmatprep.subr.mxu0 0.0
    %256 = vmatpush2.msra.mxu0 0.0
    %257 = vmatprep.subr.mxu0 0.0
    %258 = vmatpush2.msra.mxu0 0.0
    %259 = vmatprep.mubr.f32.mxu0 0.0
    %260 = vmatmul.mubr.f32.gmra.mxu0 %v168
    %v261 = vpop.f32.mrf.mxu0
    %v262 = vadd.f32 %v193, %v261
    %v263 = vpop.f32.mrf.mxu0
    %264 = vmatprep.mubr.f32.mxu0 0.0
    %265 = vmatmul.mubr.f32.gmra.mxu0 %v169
    %v266 = vpop.f32.mrf.mxu0
    %v267 = vadd.f32 %v193, %v266
    %v268 = vpop.f32.mrf.mxu0
    %269 = vdwg.mxu0
    %v270 = vadd.f32 %v262, %v68
    %v271 = vadd.f32 %v267, %v69
    %272 = vadd.xlane.f32.xlu0 %v270
    %v273 = vpop.xlane.xlu0 %272
    %274 = vadd.xlane.f32.xlu0 %v271
    %v275 = vpop.xlane.xlu0 %274
    %v276 = vmul.f32 %v273, 0.03125
    %v277 = vmul.f32 %v275, 0.03125
    %v278 = vsub.f32 %v270, %v276
    %v279 = vsub.f32 %v271, %v277
    %v280 = vlaneseq
    %v281 = vand.u32 %v280, 127
    %vm282 = vcmp.lt.s32.totalorder %v281, 32
    %v283 = vsel %vm282, 1, 0
    %v284 = vcvt.s32.f32 %v283
    %v285 = vmul.f32 %v278, %v284
    %v286 = vmul.f32 %v279, %v284
    %v287 = vmul.f32 %v285, %v285
    %v288 = vmul.f32 %v286, %v286
    %289 = vadd.xlane.f32.xlu0 %v287
    %v290 = vpop.xlane.xlu0 %289
    %291 = vadd.xlane.f32.xlu0 %v288
    %v292 = vpop.xlane.xlu0 %291
    %v293 = vmul.f32 %v290, 0.03125
    %v294 = vmul.f32 %v292, 0.03125
    %v295 = vadd.f32 %v293, 1e-06
    %v296 = vadd.f32 %v294, 1e-06
    %v297 = vrsqrt.pop %v295
    %v298 = vrsqrt.pop %v296
    %v299 = vmul.f32 %v285, %v297
    %v300 = vmul.f32 %v286, %v298
    %v302 = vlaneseq
    %v303 = vshrl.u32 %v302, 7
    %v304 = vsub.s32 0, %v303
    %v305 = vrot.slane %v187, %v304
    %v307 = vmul.f32 %v299, %v305
    %v308 = vmul.f32 %v300, %v305
    %v310 = vlaneseq
    %v311 = vshrl.u32 %v310, 7
    %v312 = vsub.s32 0, %v311
    %v313 = vrot.slane %v188, %v312
    %v315 = vadd.f32 %v307, %v313
    %v316 = vadd.f32 %v308, %v313
    %317 = vst [vmem:[#allocation8] sm:$0xff] %v315
    %318 = vst [vmem:[#allocation8 + $0x8] sm:$0xff] %v316
    // Predicated region
    $region42: #{tpu_custom_call.1} parent=1 // pred_check
      _
    $region43: #{tpu_custom_call.1} parent=1 // pred_check_branch
      %320 = sbr.rel (0) target = $region45
    $region44: #{tpu_custom_call.1} parent=1 // pred_region
      %s322 = ssub.s32 256, 256
      %323 = vsyncadd [#allocation4], %s322
      %s324 = sshll.u32 [#allocation8], 4
      %s325 = int_to_ptr.vmem [resolvable:$true] %s324
      %330 = dma.vmem_to_hbm [thread:$0]  %s325, 256, %s7, [#allocation4], 128, 128, 8
    $region45: #{tpu_custom_call.1} parent=1 // pred_fallthru
      _
    // Predicated region
    $region46: #{tpu_custom_call.1} parent=1 // pred_check
      _
    $region47: #{tpu_custom_call.1} parent=1 // pred_check_branch
      %332 = sbr.rel (0) target = $region49
    $region48: #{tpu_custom_call.1} parent=1 // pred_region
      %333 = dma.done [#allocation4], 256
    $region49: #{tpu_custom_call.1} parent=1 // pred_fallthru
      _
    %334 = vsyncpa [#allocation3], 1
    %335 = vsyncpa [#allocation6], 1
    %336 = vsyncpa [#allocation4], 1

</llo_original>
